<compile_context>
chip_gen: v5e
topology: v5e:2x2
jax: 0.10.0
libtpu: 0.0.40
codegen_flags: <defaults>
</compile_context>

<pallas_src>
import jax
import jax.numpy as jnp
from jax.experimental import pallas as pl
from jax.experimental.pallas import tpu as pltpu


def _round_up(n, m):
    return ((n + m - 1) // m) * m


def mlp_kernel(x_ref, w1_ref, b1_ref, w2_ref, b2_ref, o_ref):
    # fc1: (TB, 27) @ (27, 32), accumulate in f32 on the MXU.
    h = jnp.dot(x_ref[...], w1_ref[...], preferred_element_type=jnp.float32)
    # bias + ReLU in f32 on the VPU.
    h = jnp.maximum(h + b1_ref[...], 0.0)
    # fc2: (TB, 32) @ (32, 4); cast h to the weight dtype so bf16 weights keep
    # the MXU in bf16 (no-op when weights are f32).
    y = jnp.dot(h.astype(w2_ref.dtype), w2_ref[...],
                preferred_element_type=jnp.float32)
    o_ref[...] = (y + b2_ref[...]).astype(o_ref.dtype)


def policy_network_forward(x, w1, b1, w2, b2, *, block_b=1024, use_bf16=False):
    """Forward pass of PolicyNetwork.

    x : (B, in_dim) f32
    w1: (in_dim, hid) f32     b1: (1, hid) f32
    w2: (hid, out_dim) f32    b2: (1, out_dim) f32
    """
    B, in_dim = x.shape
    out_dim = w2.shape[1]

    if use_bf16:
        # bf16 operands for the MXU; biases / accumulation stay f32.
        x = x.astype(jnp.bfloat16)
        w1 = w1.astype(jnp.bfloat16)
        w2 = w2.astype(jnp.bfloat16)

    # Batch tile: multiple of 8 (sublane), capped by block_b and by the batch.
    tb = max(8, min(_round_up(block_b, 8), _round_up(B, 8)))
    nb = pl.cdiv(B, tb)
    out_shape = jax.ShapeDtypeStruct((B, out_dim), jnp.float32)

    if nb == 1:
        # Tiny batch: single full-array block, no grid, no pipeline machinery.
        return pl.pallas_call(mlp_kernel, out_shape=out_shape)(x, w1, b1, w2, b2)

    # Batch-tiled grid; weights/biases use constant index_maps so they are
    # fetched once and stay VMEM-resident across all batch tiles.  The ragged
    # last block (when tb does not divide B) is handled by Pallas masking:
    # garbage padded rows never mix with valid rows (no cross-row reduction)
    # and out-of-bounds writes are dropped.
    return pl.pallas_call(
        mlp_kernel,
        out_shape=out_shape,
        grid=(nb,),
        in_specs=[
            pl.BlockSpec((tb, in_dim), lambda i: (i, 0)),
            pl.BlockSpec(w1.shape, lambda i: (0, 0)),
            pl.BlockSpec(b1.shape, lambda i: (0, 0)),
            pl.BlockSpec(w2.shape, lambda i: (0, 0)),
            pl.BlockSpec(b2.shape, lambda i: (0, 0)),
        ],
        out_specs=pl.BlockSpec((tb, out_dim), lambda i: (i, 0)),
        compiler_params=pltpu.CompilerParams(
            dimension_semantics=("parallel",),  # megacore split on v7x
        ),
    )(x, w1, b1, w2, b2)


def init_params(key, input_dim=27, hidden_dim=32, output_dim=4):
    """Deterministic init mimicking torch nn.Linear default U(-1/sqrt(fan_in), 1/sqrt(fan_in))."""
    k1, k2, k3, k4 = jax.random.split(key, 4)
    bound1 = 1.0 / jnp.sqrt(jnp.float32(input_dim))
    bound2 = 1.0 / jnp.sqrt(jnp.float32(hidden_dim))
    # stored as (in, out): transpose of torch's (out, in)
    w1 = jax.random.uniform(k1, (input_dim, hidden_dim), jnp.float32, -bound1, bound1)
    b1 = jax.random.uniform(k2, (1, hidden_dim), jnp.float32, -bound1, bound1)
    w2 = jax.random.uniform(k3, (hidden_dim, output_dim), jnp.float32, -bound2, bound2)
    b2 = jax.random.uniform(k4, (1, output_dim), jnp.float32, -bound2, bound2)
    return w1, b1, w2, b2


if __name__ == "__main__":
    key = jax.random.PRNGKey(0)
    kx, kp, kx2 = jax.random.split(key, 3)

    IN, HID, OUT = 27, 32, 4
    w1, b1, w2, b2 = init_params(kp, IN, HID, OUT)

    def ref_fwd(x):
        return jnp.maximum(x @ w1 + b1, 0.0) @ w2 + b2

    # 1) Tiny batch -> grid-less single-block path.
    x_small = jax.random.normal(kx, (8, IN), jnp.float32)
    out_small = jax.block_until_ready(policy_network_forward(x_small, w1, b1, w2, b2))
    assert out_small.shape == (8, OUT)
    assert jnp.allclose(out_small, ref_fwd(x_small), atol=1e-5, rtol=1e-5)

    # 2) Larger non-divisible batch -> batch-tiled grid with a masked ragged
    #    last block (no wrapper-side padding copy).
    x_big = jax.random.normal(kx2, (200, IN), jnp.float32)
    out_big = jax.block_until_ready(
        policy_network_forward(x_big, w1, b1, w2, b2, block_b=64))
    assert out_big.shape == (200, OUT)
    assert jnp.allclose(out_big, ref_fwd(x_big), atol=1e-5, rtol=1e-5)

    # 3) Optional bf16-operand path (f32 accumulate) -> loose tolerance.
    out_bf16 = jax.block_until_ready(
        policy_network_forward(x_big, w1, b1, w2, b2, block_b=64, use_bf16=True))
    assert out_bf16.shape == (200, OUT)
    assert jnp.allclose(out_bf16, ref_fwd(x_big), atol=0.15, rtol=0.15)

    print("KERNEL_OK")
</pallas_src>

<mosaic_0001>
module attributes {stable_mosaic.version = 11 : i64} {
  func.func @mlp_kernel(%arg0: memref<8x27xf32, #tpu.memory_space<vmem>>, %arg1: memref<27x32xf32, #tpu.memory_space<vmem>>, %arg2: memref<1x32xf32, #tpu.memory_space<vmem>>, %arg3: memref<32x4xf32, #tpu.memory_space<vmem>>, %arg4: memref<1x4xf32, #tpu.memory_space<vmem>>, %arg5: memref<8x4xf32, #tpu.memory_space<vmem>>) attributes {dimension_semantics = [], scalar_prefetch = 0 : i64, scratch_operands = 0 : i64, tpu.core_type = #tpu.core_type<tc>} {
    %c0 = arith.constant 0 : index
    %c0_0 = arith.constant 0 : index
    %0 = vector.load %arg0[%c0, %c0_0] : memref<8x27xf32, #tpu.memory_space<vmem>>, vector<8x27xf32>
    %c0_1 = arith.constant 0 : index
    %c0_2 = arith.constant 0 : index
    %1 = vector.load %arg1[%c0_1, %c0_2] : memref<27x32xf32, #tpu.memory_space<vmem>>, vector<27x32xf32>
    %cst = arith.constant dense<0.000000e+00> : vector<8x32xf32>
    %2 = tpu.matmul %0, %1, %cst {dimension_numbers = #tpu.dot_dimension_numbers<[1], [0], [0], [1], [0, 0, 1, 1], [], []>} : vector<8x27xf32>, vector<27x32xf32>, vector<8x32xf32> -> vector<8x32xf32>
    %c0_3 = arith.constant 0 : index
    %c0_4 = arith.constant 0 : index
    %3 = vector.load %arg2[%c0_3, %c0_4] : memref<1x32xf32, #tpu.memory_space<vmem>>, vector<1x32xf32>
    %4 = vector.broadcast %3 : vector<1x32xf32> to vector<8x32xf32>
    %5 = arith.addf %2, %4 : vector<8x32xf32>
    %cst_5 = arith.constant 0.000000e+00 : f32
    %6 = vector.broadcast %cst_5 : f32 to vector<8x32xf32>
    %7 = arith.maximumf %5, %6 : vector<8x32xf32>
    %c0_6 = arith.constant 0 : index
    %c0_7 = arith.constant 0 : index
    %8 = vector.load %arg3[%c0_6, %c0_7] : memref<32x4xf32, #tpu.memory_space<vmem>>, vector<32x4xf32>
    %cst_8 = arith.constant dense<0.000000e+00> : vector<8x4xf32>
    %9 = tpu.matmul %7, %8, %cst_8 {dimension_numbers = #tpu.dot_dimension_numbers<[1], [0], [0], [1], [0, 0, 1, 1], [], []>} : vector<8x32xf32>, vector<32x4xf32>, vector<8x4xf32> -> vector<8x4xf32>
    %c0_9 = arith.constant 0 : index
    %c0_10 = arith.constant 0 : index
    %10 = vector.load %arg4[%c0_9, %c0_10] : memref<1x4xf32, #tpu.memory_space<vmem>>, vector<1x4xf32>
    %11 = vector.broadcast %10 : vector<1x4xf32> to vector<8x4xf32>
    %12 = arith.addf %9, %11 : vector<8x4xf32>
    %c0_11 = arith.constant 0 : index
    %c0_12 = arith.constant 0 : index
    %13 = vector.load %arg5[%c0_11, %c0_12] : memref<8x4xf32, #tpu.memory_space<vmem>>, vector<8x4xf32>
    tpu.vector_store %arg5[%c0_11, %c0_12], %12 {strides = array<i32>} : memref<8x4xf32, #tpu.memory_space<vmem>>, vector<8x4xf32>,
    return
  }
}

</mosaic_0001>

<llo_original>
// kernel: tpu_custom_call.1
$region0: #{tpu_custom_call.1}
  #allocation0 [shape = 'u32[]', space=smem, size = 0x4, offset = 0x4, fixed_abs, tag = 'smem constant byte address 0x4 - core index']
  #allocation1 [shape = 'u32[72,128]{1,0:T(1,128)}', space=vmem, size = 0x9000, scoped, tag = 'internal scratch']
  %s0 = inlined_call_operand.hbm [shape: f32[8,27], index: 0, kind: input, shape index: {}]
  %s1 = inlined_call_operand.vmem [shape: f32[27,32], index: 1, kind: input, shape index: {}]
  %s2 = inlined_call_operand.vmem [shape: f32[1,32], index: 2, kind: input, shape index: {}]
  %s3 = inlined_call_operand.vmem [shape: f32[32,4], index: 3, kind: input, shape index: {}]
  %s4 = inlined_call_operand.vmem [shape: f32[1,4], index: 4, kind: input, shape index: {}]
  %s5 = inlined_call_operand.vmem [shape: f32[8,4], index: 5, kind: output, shape index: {}]
  %s6 = sld [smem:[#allocation0]]
  $region34: #{tpu_custom_call.1} parent=0
    _
  %s8 = ssub.s32 1, %s6
  %s9 = scalar_select 0, %s8, %s6
  $region1: #{tpu_custom_call.1} parent=0
    #allocation2 [shape = 'u8[4096]{0}', space=vmem, size = 0x1000, scoped, tag = 'input window, operand 0, single buffered']
    #allocation3 [shape = 's32[1]{0}', space=sflag, size = 0x4, scoped, tag = 'scoped memory for tpu_custom_call.1']
    %10 = vsyncpa [#allocation3], 0
    // Predicated region
    $region2: #{tpu_custom_call.1} parent=1 // pred_check
      _
    $region3: #{tpu_custom_call.1} parent=1 // pred_check_branch
      %12 = sbr.rel (0) target = $region5
    $region4: #{tpu_custom_call.1} parent=1 // pred_region
      %14 = vsyncadd [#allocation3], 0
      %s16 = sshll.u32 %s0, 4
      %s17 = int_to_ptr.hbm [resolvable:$true] %s16
      %s18 = sshll.u32 [#allocation2], 4
      %s19 = int_to_ptr.vmem [resolvable:$true] %s18
      %21 = dma.hbm_to_vmem [thread:$0]  %s17, 128, %s19, [#allocation3]
    $region5: #{tpu_custom_call.1} parent=1 // pred_fallthru
      _
    // Predicated region
    $region6: #{tpu_custom_call.1} parent=1 // pred_check
      _
    $region7: #{tpu_custom_call.1} parent=1 // pred_check_branch
      %23 = sbr.rel (0) target = $region9
    $region8: #{tpu_custom_call.1} parent=1 // pred_region
      _
    $region9: #{tpu_custom_call.1} parent=1 // pred_fallthru
      _
    // Predicated region
    $region10: #{tpu_custom_call.1} parent=1 // pred_check
      _
    $region11: #{tpu_custom_call.1} parent=1 // pred_check_branch
      %25 = sbr.rel (0) target = $region13
    $region12: #{tpu_custom_call.1} parent=1 // pred_region
      _
    $region13: #{tpu_custom_call.1} parent=1 // pred_fallthru
      _
    // Predicated region
    $region14: #{tpu_custom_call.1} parent=1 // pred_check
      _
    $region15: #{tpu_custom_call.1} parent=1 // pred_check_branch
      %27 = sbr.rel (0) target = $region17
    $region16: #{tpu_custom_call.1} parent=1 // pred_region
      _
    $region17: #{tpu_custom_call.1} parent=1 // pred_fallthru
      _
    // Predicated region
    $region18: #{tpu_custom_call.1} parent=1 // pred_check
      _
    $region19: #{tpu_custom_call.1} parent=1 // pred_check_branch
      %29 = sbr.rel (0) target = $region21
    $region20: #{tpu_custom_call.1} parent=1 // pred_region
      _
    $region21: #{tpu_custom_call.1} parent=1 // pred_fallthru
      _
    // Predicated region
    $region22: #{tpu_custom_call.1} parent=1 // pred_check
      _
    $region23: #{tpu_custom_call.1} parent=1 // pred_check_branch
      %31 = sbr.rel (0) target = $region25
    $region24: #{tpu_custom_call.1} parent=1 // pred_region
      %33 = dma.done [#allocation3], 128
    $region25: #{tpu_custom_call.1} parent=1 // pred_fallthru
      _
    %v34 = vld [vmem:[#allocation2] sm:$0xff]
    %v35 = vld [vmem:[%s1] sm:$0xff]
    %v36 = vld [vmem:[%s1 + $0x8] sm:$0xff]
    %v37 = vld [vmem:[%s1 + $0x10] sm:$0xff]
    %v38 = vld [vmem:[%s1 + $0x18] sm:$0x7]
    %v39 = vld [vmem:[%s2] sm:$0x1]
    %v41 = vperm.slane %v39, 0
    %vm43 = vcmask 220160
    %v45 = vsel %vm43, %v34, 0
    %vm47 = vcmask 1042432
    %v49 = vsel %vm47, %v38, 0
    %51 = vmatpush.msra.mxu0 0.0
    %52 = vmatpush.msra.mxu0 0.0
    %53 = vmatpush.msra.mxu0 0.0
    %54 = vmatpush.msra.mxu0 0.0
    %55 = vmatpush.msra.mxu0 0.0
    %56 = vmatpush.msra.mxu0 0.0
    %57 = vmatpush.msra.mxu0 0.0
    %58 = vmatpush.msra.mxu0 0.0
    %59 = vmatpush.msra.mxu0 0.0
    %60 = vmatpush.msra.mxu0 0.0
    %61 = vmatpush.msra.mxu0 0.0
    %62 = vmatpush.msra.mxu0 0.0
    %63 = vmatpush.msra.mxu0 %v49
    %64 = vmatpush.msra.mxu0 %v37
    %65 = vmatpush.msra.mxu0 %v36
    %66 = vmatpush.msra.mxu0 %v35
    %67 = vmatmul.f32.gmra.mxu0 %v45
    %v68 = vpop.f32.mrf.mxu0
    %v69 = vadd.f32 %v41, %v68
    %70 = vdwg.mxu0
    %v71 = vmax.f32 %v69, 0.0
    %v72 = vld [vmem:[%s3] sm:$0xff]
    %v73 = vld [vmem:[%s3 + $0x8] sm:$0xff]
    %v74 = vld [vmem:[%s3 + $0x10] sm:$0xff]
    %v75 = vld [vmem:[%s3 + $0x18] sm:$0xff]
    %v76 = vld [vmem:[%s4] sm:$0x1]
    %v78 = vperm.slane %v76, 0
    %vm80 = vcmask 261120
    %v82 = vsel %vm80, %v71, 0
    %84 = vmatpush.msra.mxu0 0.0
    %85 = vmatpush.msra.mxu0 0.0
    %86 = vmatpush.msra.mxu0 0.0
    %87 = vmatpush.msra.mxu0 0.0
    %88 = vmatpush.msra.mxu0 0.0
    %89 = vmatpush.msra.mxu0 0.0
    %90 = vmatpush.msra.mxu0 0.0
    %91 = vmatpush.msra.mxu0 0.0
    %92 = vmatpush.msra.mxu0 0.0
    %93 = vmatpush.msra.mxu0 0.0
    %94 = vmatpush.msra.mxu0 0.0
    %95 = vmatpush.msra.mxu0 0.0
    %96 = vmatpush.msra.mxu0 %v75
    %97 = vmatpush.msra.mxu0 %v74
    %98 = vmatpush.msra.mxu0 %v73
    %99 = vmatpush.msra.mxu0 %v72
    %100 = vmatmul.f32.gmra.mxu0 %v82
    %v101 = vpop.f32.mrf.mxu0
    %v102 = vadd.f32 %v78, %v101
    %103 = vdwg.mxu0
    %vm104 = vcmask 31744
    %105 = vst.msk [vmem:[%s5] sm:$0xff] %vm104, %v102
    // Predicated region
    $region26: #{tpu_custom_call.1} parent=1 // pred_check
      _
    $region27: #{tpu_custom_call.1} parent=1 // pred_check_branch
      %107 = sbr.rel (0) target = $region29
    $region28: #{tpu_custom_call.1} parent=1 // pred_region
      _
    $region29: #{tpu_custom_call.1} parent=1 // pred_fallthru
      _
    // Predicated region
    $region30: #{tpu_custom_call.1} parent=1 // pred_check
      _
    $region31: #{tpu_custom_call.1} parent=1 // pred_check_branch
      %109 = sbr.rel (0) target = $region33
    $region32: #{tpu_custom_call.1} parent=1 // pred_region
      _
    $region33: #{tpu_custom_call.1} parent=1 // pred_fallthru
      _
    %110 = vsyncpa [#allocation3], 1

</llo_original>
